<compile_context>
chip_gen: v7x
topology: tpu7x:2x2x1
jax: 0.10.0
libtpu: 0.0.40
codegen_flags: <defaults>
</compile_context>

<pallas_src>
import jax
import jax.numpy as jnp
from jax.experimental import pallas as pl
from jax.experimental.pallas import tpu as pltpu


def _round_up(n, m):
    return ((n + m - 1) // m) * m


def _pick_tile_b(B, S, itemsize, vmem_budget_bytes=8 * 1024 * 1024):
    """Largest sublane-aligned batch tile whose double-buffered streams fit the budget."""
    # 5 streamed arrays (x, h, c in; h_new, c_new out), double-buffered.
    bytes_per_row = 5 * 2 * S * itemsize
    tb = max(8, (vmem_budget_bytes // max(bytes_per_row, 1)) // 8 * 8)
    tb = min(tb, 1024)                      # keep grid steps around for pipelining
    tb = min(tb, _round_up(B, 8))           # never bigger than the (padded) batch
    return tb


def _lstm_cell_kernel(x_ref, h_ref, c_ref, wx_ref, wh_ref, b_ref,
                      h_new_ref, c_new_ref):
    """One batch tile of the LSTM cell. Gate layout along lanes: [i | f | o | g]."""
    x = x_ref[...].astype(jnp.float32)
    h = h_ref[...].astype(jnp.float32)
    c = c_ref[...].astype(jnp.float32)

    gates = jnp.dot(x, wx_ref[...].astype(jnp.float32),
                    preferred_element_type=jnp.float32)
    gates = gates + jnp.dot(h, wh_ref[...].astype(jnp.float32),
                            preferred_element_type=jnp.float32)
    gates = gates + b_ref[...].astype(jnp.float32)   # (1, 4S) broadcasts over rows

    s = x.shape[-1]
    i_g = jax.nn.sigmoid(gates[:, 0 * s:1 * s])
    f_g = jax.nn.sigmoid(gates[:, 1 * s:2 * s])
    o_g = jax.nn.sigmoid(gates[:, 2 * s:3 * s])
    g_g = jnp.tanh(gates[:, 3 * s:4 * s])

    c_new = f_g * c + i_g * g_g
    h_new = o_g * jnp.tanh(c_new)

    c_new_ref[...] = c_new.astype(c_new_ref.dtype)
    h_new_ref[...] = h_new.astype(h_new_ref.dtype)


def lstm_unit_forward(x, h, c, wx, wh, b, *, tile_b=None):
    """LSTM_unit.forward via Pallas.

    x, h, c : (B, S)
    wx, wh  : (S, 4S) pre-transposed gate-concatenated weights (x- / h-path)
    b       : (4S,)   combined bias (x-path bias + h-path bias per gate)
    Returns (h_new, c_new), each (B, S), in x.dtype.
    """
    B, S = x.shape
    assert h.shape == (B, S) and c.shape == (B, S)
    assert wx.shape == (S, 4 * S) and wh.shape == (S, 4 * S) and b.shape == (4 * S,)

    # Batch tile: multiple of 8 sublanes; pad only the ragged batch tail.
    if tile_b is None:
        TB = _pick_tile_b(B, S, jnp.dtype(x.dtype).itemsize)
    else:
        TB = min(_round_up(tile_b, 8), _round_up(B, 8))
    Bp = _round_up(B, TB)
    if Bp != B:
        pad = ((0, Bp - B), (0, 0))
        x = jnp.pad(x, pad)
        h = jnp.pad(h, pad)
        c = jnp.pad(c, pad)

    b2 = b.reshape(1, 4 * S)
    grid = (Bp // TB,)
    out_dtype = x.dtype

    tile_spec = pl.BlockSpec((TB, S), lambda i: (i, 0))       # streamed per tile
    w_spec = pl.BlockSpec((S, 4 * S), lambda i: (0, 0))       # resident across grid
    b_spec = pl.BlockSpec((1, 4 * S), lambda i: (0, 0))

    flops = 2 * Bp * S * (8 * S)            # two (TB,S)@(S,4S) matmuls per tile
    bytes_accessed = (5 * Bp * S + 2 * S * 4 * S + 4 * S) * jnp.dtype(out_dtype).itemsize

    h_new, c_new = pl.pallas_call(
        _lstm_cell_kernel,
        out_shape=(jax.ShapeDtypeStruct((Bp, S), out_dtype),
                   jax.ShapeDtypeStruct((Bp, S), out_dtype)),
        grid=grid,
        in_specs=[tile_spec, tile_spec, tile_spec, w_spec, w_spec, b_spec],
        out_specs=(tile_spec, tile_spec),
        compiler_params=pltpu.CompilerParams(
            dimension_semantics=("parallel",),
            vmem_limit_bytes=64 << 20),
        cost_estimate=pl.CostEstimate(
            flops=flops, transcendentals=5 * Bp * S, bytes_accessed=bytes_accessed),
    )(x, h, c, wx, wh, b2)

    return h_new[:B], c_new[:B]


# ---------------------------------------------------------------------------
# Parameter construction (mirrors the 8 nn.Linear(size, size) layers) and a
# pure-JAX reference of LSTM_unit.forward for verification.
# ---------------------------------------------------------------------------

_GATE_NAMES = ["xi", "hi", "xf", "hf", "xo", "ho", "xc", "hc"]


def make_params(key, size, dtype=jnp.float32):
    ks = jax.random.split(key, 2 * len(_GATE_NAMES))
    bound = 1.0 / (size ** 0.5)
    params = {}
    for idx, name in enumerate(_GATE_NAMES):
        kw, kb = ks[2 * idx], ks[2 * idx + 1]
        params[name + "_w"] = jax.random.uniform(kw, (size, size), dtype, -bound, bound)
        params[name + "_b"] = jax.random.uniform(kb, (size,), dtype, -bound, bound)
    return params


def pack_params(params):
    """Pack per-gate (S,S) PyTorch-style weights into fused (S,4S) matrices."""
    wx = jnp.concatenate([params["xi_w"].T, params["xf_w"].T,
                          params["xo_w"].T, params["xc_w"].T], axis=1)
    wh = jnp.concatenate([params["hi_w"].T, params["hf_w"].T,
                          params["ho_w"].T, params["hc_w"].T], axis=1)
    b = jnp.concatenate([params["xi_b"] + params["hi_b"],
                         params["xf_b"] + params["hf_b"],
                         params["xo_b"] + params["ho_b"],
                         params["xc_b"] + params["hc_b"]])
    return wx, wh, b


def lstm_unit_ref(x, h, c, params):
    def lin(a, w, bb):
        return a @ w.T + bb
    i = jax.nn.sigmoid(lin(x, params["xi_w"], params["xi_b"]) +
                       lin(h, params["hi_w"], params["hi_b"]))
    f = jax.nn.sigmoid(lin(x, params["xf_w"], params["xf_b"]) +
                       lin(h, params["hf_w"], params["hf_b"]))
    o = jax.nn.sigmoid(lin(x, params["xo_w"], params["xo_b"]) +
                       lin(h, params["ho_w"], params["ho_b"]))
    g = jnp.tanh(lin(x, params["xc_w"], params["xc_b"]) +
                 lin(h, params["hc_w"], params["hc_b"]))
    c_new = f * c + i * g
    h_new = o * jnp.tanh(c_new)
    return h_new, c_new


if __name__ == "__main__":
    key = jax.random.PRNGKey(0)
    kp, kx, kh, kc = jax.random.split(key, 4)

    # Small shapes consistent with the module: batch=2, hidden size=32.
    B, S = 2, 32

    params = make_params(kp, S)
    wx, wh, b = pack_params(params)

    x = jax.random.normal(kx, (B, S), dtype=jnp.float32)
    h = jax.random.normal(kh, (B, S), dtype=jnp.float32)
    c = jax.random.normal(kc, (B, S), dtype=jnp.float32)

    h_new, c_new = lstm_unit_forward(x, h, c, wx, wh, b)
    jax.block_until_ready((h_new, c_new))

    h_ref, c_ref = lstm_unit_ref(x, h, c, params)
    assert jnp.allclose(h_new, h_ref, rtol=1e-5, atol=1e-5), (h_new, h_ref)
    assert jnp.allclose(c_new, c_ref, rtol=1e-5, atol=1e-5), (c_new, c_ref)

    print("KERNEL_OK")
</pallas_src>

<mosaic_0001>
module attributes {stable_mosaic.version = 11 : i64} {
  func.func @_lstm_cell_kernel(%arg0: i32, %arg1: memref<8x32xf32, #tpu.memory_space<vmem>>, %arg2: memref<8x32xf32, #tpu.memory_space<vmem>>, %arg3: memref<8x32xf32, #tpu.memory_space<vmem>>, %arg4: memref<32x128xf32, #tpu.memory_space<vmem>>, %arg5: memref<32x128xf32, #tpu.memory_space<vmem>>, %arg6: memref<1x128xf32, #tpu.memory_space<vmem>>, %arg7: memref<8x32xf32, #tpu.memory_space<vmem>>, %arg8: memref<8x32xf32, #tpu.memory_space<vmem>>) attributes {dimension_semantics = [#tpu.dimension_semantics<parallel>], iteration_bounds = array<i64: 1>, scalar_prefetch = 0 : i64, scratch_operands = 0 : i64, tpu.core_type = #tpu.core_type<tc>, window_params = [{transform_indices = @transform_0, window_bounds = array<i64: 8, 32>}, {transform_indices = @transform_1, window_bounds = array<i64: 8, 32>}, {transform_indices = @transform_2, window_bounds = array<i64: 8, 32>}, {pipeline_mode = #tpu.pipeline_mode<synchronous>, transform_indices = @transform_3, window_bounds = array<i64: 32, 128>}, {pipeline_mode = #tpu.pipeline_mode<synchronous>, transform_indices = @transform_4, window_bounds = array<i64: 32, 128>}, {pipeline_mode = #tpu.pipeline_mode<synchronous>, transform_indices = @transform_5, window_bounds = array<i64: 1, 128>}, {transform_indices = @transform_6, window_bounds = array<i64: 8, 32>}, {transform_indices = @transform_7, window_bounds = array<i64: 8, 32>}]} {
    %c0 = arith.constant 0 : index
    %c0_0 = arith.constant 0 : index
    %0 = vector.load %arg1[%c0, %c0_0] : memref<8x32xf32, #tpu.memory_space<vmem>>, vector<8x32xf32>
    %c0_1 = arith.constant 0 : index
    %c0_2 = arith.constant 0 : index
    %1 = vector.load %arg2[%c0_1, %c0_2] : memref<8x32xf32, #tpu.memory_space<vmem>>, vector<8x32xf32>
    %c0_3 = arith.constant 0 : index
    %c0_4 = arith.constant 0 : index
    %2 = vector.load %arg3[%c0_3, %c0_4] : memref<8x32xf32, #tpu.memory_space<vmem>>, vector<8x32xf32>
    %c0_5 = arith.constant 0 : index
    %c0_6 = arith.constant 0 : index
    %3 = vector.load %arg4[%c0_5, %c0_6] : memref<32x128xf32, #tpu.memory_space<vmem>>, vector<32x128xf32>
    %cst = arith.constant dense<0.000000e+00> : vector<8x128xf32>
    %4 = tpu.matmul %0, %3, %cst {dimension_numbers = #tpu.dot_dimension_numbers<[1], [0], [0], [1], [0, 0, 1, 1], [], []>} : vector<8x32xf32>, vector<32x128xf32>, vector<8x128xf32> -> vector<8x128xf32>
    %c0_7 = arith.constant 0 : index
    %c0_8 = arith.constant 0 : index
    %5 = vector.load %arg5[%c0_7, %c0_8] : memref<32x128xf32, #tpu.memory_space<vmem>>, vector<32x128xf32>
    %cst_9 = arith.constant dense<0.000000e+00> : vector<8x128xf32>
    %6 = tpu.matmul %1, %5, %cst_9 {dimension_numbers = #tpu.dot_dimension_numbers<[1], [0], [0], [1], [0, 0, 1, 1], [], []>} : vector<8x32xf32>, vector<32x128xf32>, vector<8x128xf32> -> vector<8x128xf32>
    %7 = arith.addf %4, %6 : vector<8x128xf32>
    %c0_10 = arith.constant 0 : index
    %c0_11 = arith.constant 0 : index
    %8 = vector.load %arg6[%c0_10, %c0_11] : memref<1x128xf32, #tpu.memory_space<vmem>>, vector<1x128xf32>
    %9 = vector.broadcast %8 : vector<1x128xf32> to vector<8x128xf32>
    %10 = arith.addf %7, %9 : vector<8x128xf32>
    %11 = vector.extract_strided_slice %10 {offsets = [0, 0], sizes = [8, 32], strides = [1, 1]} : vector<8x128xf32> to vector<8x32xf32>
    %12 = arith.negf %11 : vector<8x32xf32>
    %13 = math.exp %12 : vector<8x32xf32>
    %cst_12 = arith.constant 1.000000e+00 : f32
    %14 = vector.broadcast %cst_12 : f32 to vector<8x32xf32>
    %15 = arith.addf %14, %13 : vector<8x32xf32>
    %16 = arith.divf %14, %15 : vector<8x32xf32>
    %17 = vector.extract_strided_slice %10 {offsets = [0, 32], sizes = [8, 32], strides = [1, 1]} : vector<8x128xf32> to vector<8x32xf32>
    %18 = arith.negf %17 : vector<8x32xf32>
    %19 = math.exp %18 : vector<8x32xf32>
    %cst_13 = arith.constant 1.000000e+00 : f32
    %20 = vector.broadcast %cst_13 : f32 to vector<8x32xf32>
    %21 = arith.addf %20, %19 : vector<8x32xf32>
    %22 = arith.divf %20, %21 : vector<8x32xf32>
    %23 = vector.extract_strided_slice %10 {offsets = [0, 64], sizes = [8, 32], strides = [1, 1]} : vector<8x128xf32> to vector<8x32xf32>
    %24 = arith.negf %23 : vector<8x32xf32>
    %25 = math.exp %24 : vector<8x32xf32>
    %cst_14 = arith.constant 1.000000e+00 : f32
    %26 = vector.broadcast %cst_14 : f32 to vector<8x32xf32>
    %27 = arith.addf %26, %25 : vector<8x32xf32>
    %28 = arith.divf %26, %27 : vector<8x32xf32>
    %29 = vector.extract_strided_slice %10 {offsets = [0, 96], sizes = [8, 32], strides = [1, 1]} : vector<8x128xf32> to vector<8x32xf32>
    %30 = math.tanh %29 : vector<8x32xf32>
    %31 = arith.mulf %22, %2 : vector<8x32xf32>
    %32 = arith.mulf %16, %30 : vector<8x32xf32>
    %33 = arith.addf %31, %32 : vector<8x32xf32>
    %34 = math.tanh %33 : vector<8x32xf32>
    %35 = arith.mulf %28, %34 : vector<8x32xf32>
    %c0_15 = arith.constant 0 : index
    %c0_16 = arith.constant 0 : index
    %36 = vector.load %arg8[%c0_15, %c0_16] : memref<8x32xf32, #tpu.memory_space<vmem>>, vector<8x32xf32>
    tpu.vector_store %arg8[%c0_15, %c0_16], %33 {strides = array<i32>} : memref<8x32xf32, #tpu.memory_space<vmem>>, vector<8x32xf32>,
    %c0_17 = arith.constant 0 : index
    %c0_18 = arith.constant 0 : index
    %37 = vector.load %arg7[%c0_17, %c0_18] : memref<8x32xf32, #tpu.memory_space<vmem>>, vector<8x32xf32>
    tpu.vector_store %arg7[%c0_17, %c0_18], %35 {strides = array<i32>} : memref<8x32xf32, #tpu.memory_space<vmem>>, vector<8x32xf32>,
    return
  }
  func.func @transform_0(%arg0: i32) -> (i32, i32) {
    %c0_i32 = arith.constant 0 : i32
    %c0_i32_0 = arith.constant 0 : i32
    return %arg0, %c0_i32 : i32, i32
  }
  func.func @transform_1(%arg0: i32) -> (i32, i32) {
    %c0_i32 = arith.constant 0 : i32
    %c0_i32_0 = arith.constant 0 : i32
    return %arg0, %c0_i32 : i32, i32
  }
  func.func @transform_2(%arg0: i32) -> (i32, i32) {
    %c0_i32 = arith.constant 0 : i32
    %c0_i32_0 = arith.constant 0 : i32
    return %arg0, %c0_i32 : i32, i32
  }
  func.func @transform_3(%arg0: i32) -> (i32, i32) {
    %c0_i32 = arith.constant 0 : i32
    %c0_i32_0 = arith.constant 0 : i32
    %c0_i32_1 = arith.constant 0 : i32
    return %c0_i32, %c0_i32_0 : i32, i32
  }
  func.func @transform_4(%arg0: i32) -> (i32, i32) {
    %c0_i32 = arith.constant 0 : i32
    %c0_i32_0 = arith.constant 0 : i32
    %c0_i32_1 = arith.constant 0 : i32
    return %c0_i32, %c0_i32_0 : i32, i32
  }
  func.func @transform_5(%arg0: i32) -> (i32, i32) {
    %c0_i32 = arith.constant 0 : i32
    %c0_i32_0 = arith.constant 0 : i32
    %c0_i32_1 = arith.constant 0 : i32
    return %c0_i32, %c0_i32_0 : i32, i32
  }
  func.func @transform_6(%arg0: i32) -> (i32, i32) {
    %c0_i32 = arith.constant 0 : i32
    %c0_i32_0 = arith.constant 0 : i32
    return %arg0, %c0_i32 : i32, i32
  }
  func.func @transform_7(%arg0: i32) -> (i32, i32) {
    %c0_i32 = arith.constant 0 : i32
    %c0_i32_0 = arith.constant 0 : i32
    return %arg0, %c0_i32 : i32, i32
  }
}

</mosaic_0001>

<llo_original>
// kernel: tpu_custom_call.1
$region0: #{tpu_custom_call.1}
  #allocation0 [shape = 'u32[]', space=smem, size = 0x4, offset = 0x4, fixed_abs, tag = 'smem constant byte address 0x4 - core index']
  #allocation1 [shape = 'u32[144,128]{1,0:T(1,128)}', space=vmem, size = 0x12000, scoped, tag = 'internal scratch']
  %s0 = inlined_call_operand.hbm [shape: f32[8,32], index: 0, kind: input, shape index: {}]
  %s1 = inlined_call_operand.hbm [shape: f32[8,32], index: 1, kind: input, shape index: {}]
  %s2 = inlined_call_operand.hbm [shape: f32[8,32], index: 2, kind: input, shape index: {}]
  %s3 = inlined_call_operand.hbm [shape: f32[32,128], index: 3, kind: input, shape index: {}]
  %s4 = inlined_call_operand.hbm [shape: f32[32,128], index: 4, kind: input, shape index: {}]
  %s5 = inlined_call_operand.hbm [shape: f32[1,128], index: 5, kind: input, shape index: {}]
  %s6 = inlined_call_operand.hbm [shape: f32[8,32], index: 6, kind: output, shape index: {0}]
  %s7 = inlined_call_operand.hbm [shape: f32[8,32], index: 7, kind: output, shape index: {1}]
  %8 = xla_tuple %s6, %s7
  %s9 = sld [smem:[#allocation0]]
  $region66: #{tpu_custom_call.1} parent=0
    _
  %s11 = ssub.s32 1, %s9
  %s12 = scalar_select 0, %s11, %s9
  $region1: #{tpu_custom_call.1} parent=0
    #allocation2 [shape = 'u8[4096]{0}', space=vmem, size = 0x1000, scoped, tag = 'input window, operand 0, single buffered']
    #allocation3 [shape = 's32[1]{0}', space=sflag, size = 0x4, scoped, tag = 'scoped memory for tpu_custom_call.1']
    #allocation4 [shape = 's32[1]{0}', space=sflag, size = 0x4, scoped, tag = 'scoped memory for tpu_custom_call.1']
    #allocation5 [shape = 'u8[4096]{0}', space=vmem, size = 0x1000, scoped, tag = 'input window, operand 1, single buffered']
    #allocation6 [shape = 's32[1]{0}', space=sflag, size = 0x4, scoped, tag = 'scoped memory for tpu_custom_call.1']
    #allocation7 [shape = 'u8[4096]{0}', space=vmem, size = 0x1000, scoped, tag = 'input window, operand 2, single buffered']
    #allocation8 [shape = 'u8[16384]{0}', space=vmem, size = 0x4000, scoped, tag = 'input window, operand 3, single buffered']
    #allocation9 [shape = 's32[1]{0}', space=sflag, size = 0x4, scoped, tag = 'scoped memory for tpu_custom_call.1']
    #allocation10 [shape = 'u8[16384]{0}', space=vmem, size = 0x4000, scoped, tag = 'input window, operand 4, single buffered']
    #allocation11 [shape = 'u8[512]{0}', space=vmem, size = 0x400, scoped, tag = 'input window, operand 5, single buffered']
    #allocation12 [shape = 's32[1]{0}', space=sflag, size = 0x4, scoped, tag = 'scoped memory for tpu_custom_call.1']
    #allocation13 [shape = 'u8[4096]{0}', space=vmem, size = 0x1000, scoped, tag = 'output window, operand 0, single buffered']
    #allocation14 [shape = 'u8[4096]{0}', space=vmem, size = 0x1000, scoped, tag = 'output window, operand 1, single buffered']
    #allocation15 [shape = 's32[1]{0}', space=sflag, size = 0x4, scoped, tag = 'scoped memory for tpu_custom_call.1']
    %13 = vsyncpa [#allocation3], 0
    %14 = vsyncpa [#allocation6], 0
    %15 = vsyncpa [#allocation9], 0
    %16 = vsyncpa [#allocation12], 0
    %17 = vsyncpa [#allocation4], 0
    %18 = vsyncpa [#allocation15], 0
    // Predicated region
    $region2: #{tpu_custom_call.1} parent=1 // pred_check
      _
    $region3: #{tpu_custom_call.1} parent=1 // pred_check_branch
      %20 = sbr.rel (0) target = $region5
    $region4: #{tpu_custom_call.1} parent=1 // pred_region
      %s22 = ssub.s32 128, 128
      %23 = vsyncadd [#allocation3], %s22
      %s25 = sshll.u32 [#allocation2], 4
      %s26 = int_to_ptr.vmem [resolvable:$true] %s25
      %28 = dma.hbm_to_vmem [thread:$0]  %s0, 128, %s26, [#allocation3]
    $region5: #{tpu_custom_call.1} parent=1 // pred_fallthru
      _
    // Predicated region
    $region6: #{tpu_custom_call.1} parent=1 // pred_check
      _
    $region7: #{tpu_custom_call.1} parent=1 // pred_check_branch
      %30 = sbr.rel (0) target = $region9
    $region8: #{tpu_custom_call.1} parent=1 // pred_region
      %s32 = ssub.s32 128, 128
      %33 = vsyncadd [#allocation6], %s32
      %s35 = sshll.u32 [#allocation5], 4
      %s36 = int_to_ptr.vmem [resolvable:$true] %s35
      %38 = dma.hbm_to_vmem [thread:$0]  %s1, 128, %s36, [#allocation6]
    $region9: #{tpu_custom_call.1} parent=1 // pred_fallthru
      _
    // Predicated region
    $region10: #{tpu_custom_call.1} parent=1 // pred_check
      _
    $region11: #{tpu_custom_call.1} parent=1 // pred_check_branch
      %40 = sbr.rel (0) target = $region13
    $region12: #{tpu_custom_call.1} parent=1 // pred_region
      %s42 = ssub.s32 128, 128
      %43 = vsyncadd [#allocation6], %s42
      %s45 = sshll.u32 [#allocation7], 4
      %s46 = int_to_ptr.vmem [resolvable:$true] %s45
      %48 = dma.hbm_to_vmem [thread:$0]  %s2, 128, %s46, [#allocation6]
    $region13: #{tpu_custom_call.1} parent=1 // pred_fallthru
      _
    // Predicated region
    $region14: #{tpu_custom_call.1} parent=1 // pred_check
      _
    $region15: #{tpu_custom_call.1} parent=1 // pred_check_branch
      %50 = sbr.rel (0) target = $region17
    $region16: #{tpu_custom_call.1} parent=1 // pred_region
      %s52 = ssub.s32 512, 512
      %53 = vsyncadd [#allocation9], %s52
      %s54 = sshll.u32 [#allocation8], 4
      %s55 = int_to_ptr.vmem [resolvable:$true] %s54
      %60 = dma.hbm_to_vmem [thread:$0]  %s3, 512, %s55, [#allocation9], 128, 128, 8
    $region17: #{tpu_custom_call.1} parent=1 // pred_fallthru
      _
    // Predicated region
    $region18: #{tpu_custom_call.1} parent=1 // pred_check
      _
    $region19: #{tpu_custom_call.1} parent=1 // pred_check_branch
      %62 = sbr.rel (0) target = $region21
    $region20: #{tpu_custom_call.1} parent=1 // pred_region
      %s64 = ssub.s32 512, 512
      %65 = vsyncadd [#allocation9], %s64
      %s66 = sshll.u32 [#allocation10], 4
      %s67 = int_to_ptr.vmem [resolvable:$true] %s66
      %72 = dma.hbm_to_vmem [thread:$0]  %s4, 512, %s67, [#allocation9], 128, 128, 8
    $region21: #{tpu_custom_call.1} parent=1 // pred_fallthru
      _
    // Predicated region
    $region22: #{tpu_custom_call.1} parent=1 // pred_check
      _
    $region23: #{tpu_custom_call.1} parent=1 // pred_check_branch
      %74 = sbr.rel (0) target = $region25
    $region24: #{tpu_custom_call.1} parent=1 // pred_region
      %s76 = ssub.s32 16, 16
      %77 = vsyncadd [#allocation12], %s76
      %s79 = sshll.u32 [#allocation11], 4
      %s80 = int_to_ptr.vmem [resolvable:$true] %s79
      %82 = dma.hbm_to_vmem [thread:$0]  %s5, 16, %s80, [#allocation12]
    $region25: #{tpu_custom_call.1} parent=1 // pred_fallthru
      _
    // Predicated region
    $region26: #{tpu_custom_call.1} parent=1 // pred_check
      _
    $region27: #{tpu_custom_call.1} parent=1 // pred_check_branch
      %84 = sbr.rel (0) target = $region29
    $region28: #{tpu_custom_call.1} parent=1 // pred_region
      %85 = dma.done [#allocation3], 128
    $region29: #{tpu_custom_call.1} parent=1 // pred_fallthru
      _
    // Predicated region
    $region30: #{tpu_custom_call.1} parent=1 // pred_check
      _
    $region31: #{tpu_custom_call.1} parent=1 // pred_check_branch
      %87 = sbr.rel (0) target = $region33
    $region32: #{tpu_custom_call.1} parent=1 // pred_region
      %88 = dma.done [#allocation6], 128
    $region33: #{tpu_custom_call.1} parent=1 // pred_fallthru
      _
    // Predicated region
    $region34: #{tpu_custom_call.1} parent=1 // pred_check
      _
    $region35: #{tpu_custom_call.1} parent=1 // pred_check_branch
      %90 = sbr.rel (0) target = $region37
    $region36: #{tpu_custom_call.1} parent=1 // pred_region
      %91 = dma.done [#allocation6], 128
    $region37: #{tpu_custom_call.1} parent=1 // pred_fallthru
      _
    // Predicated region
    $region38: #{tpu_custom_call.1} parent=1 // pred_check
      _
    $region39: #{tpu_custom_call.1} parent=1 // pred_check_branch
      %93 = sbr.rel (0) target = $region41
    $region40: #{tpu_custom_call.1} parent=1 // pred_region
      %94 = dma.done [#allocation9], 512
    $region41: #{tpu_custom_call.1} parent=1 // pred_fallthru
      _
    // Predicated region
    $region42: #{tpu_custom_call.1} parent=1 // pred_check
      _
    $region43: #{tpu_custom_call.1} parent=1 // pred_check_branch
      %96 = sbr.rel (0) target = $region45
    $region44: #{tpu_custom_call.1} parent=1 // pred_region
      %97 = dma.done [#allocation9], 512
    $region45: #{tpu_custom_call.1} parent=1 // pred_fallthru
      _
    // Predicated region
    $region46: #{tpu_custom_call.1} parent=1 // pred_check
      _
    $region47: #{tpu_custom_call.1} parent=1 // pred_check_branch
      %99 = sbr.rel (0) target = $region49
    $region48: #{tpu_custom_call.1} parent=1 // pred_region
      %100 = dma.done [#allocation12], 16
    $region49: #{tpu_custom_call.1} parent=1 // pred_fallthru
      _
    %v101 = vld [vmem:[#allocation2] sm:$0xff]
    %v102 = vld [vmem:[#allocation5] sm:$0xff]
    %v103 = vld [vmem:[#allocation7] sm:$0xff]
    %v104 = vld [vmem:[#allocation8] sm:$0xff]
    %v105 = vld [vmem:[#allocation8 + $0x8] sm:$0xff]
    %v106 = vld [vmem:[#allocation8 + $0x10] sm:$0xff]
    %v107 = vld [vmem:[#allocation8 + $0x18] sm:$0xff]
    %v108 = vld [vmem:[#allocation10] sm:$0xff]
    %v109 = vld [vmem:[#allocation10 + $0x8] sm:$0xff]
    %v110 = vld [vmem:[#allocation10 + $0x10] sm:$0xff]
    %v111 = vld [vmem:[#allocation10 + $0x18] sm:$0xff]
    %vm112 = vcmask 261120
    %v114 = vsel %vm112, %v102, 0
    %116 = vmatprep.subr.mxu0 0.0
    %117 = vmatpush1.msra.mxu0 %v108
    %118 = vmatprep.subr.mxu0 0.0
    %119 = vmatpush1.msra.mxu0 %v109
    %120 = vmatprep.subr.mxu0 0.0
    %121 = vmatpush1.msra.mxu0 %v110
    %122 = vmatprep.subr.mxu0 0.0
    %123 = vmatpush1.msra.mxu0 %v111
    %124 = vmatprep.subr.mxu0 0.0
    %125 = vmatpush1.msra.mxu0 0.0
    %126 = vmatprep.subr.mxu0 0.0
    %127 = vmatpush1.msra.mxu0 0.0
    %128 = vmatprep.subr.mxu0 0.0
    %129 = vmatpush1.msra.mxu0 0.0
    %130 = vmatprep.subr.mxu0 0.0
    %131 = vmatpush1.msra.mxu0 0.0
    %132 = vmatprep.subr.mxu0 0.0
    %133 = vmatpush1.msra.mxu0 0.0
    %134 = vmatprep.subr.mxu0 0.0
    %135 = vmatpush1.msra.mxu0 0.0
    %136 = vmatprep.subr.mxu0 0.0
    %137 = vmatpush1.msra.mxu0 0.0
    %138 = vmatprep.subr.mxu0 0.0
    %139 = vmatpush1.msra.mxu0 0.0
    %140 = vmatprep.subr.mxu0 0.0
    %141 = vmatpush1.msra.mxu0 0.0
    %142 = vmatprep.subr.mxu0 0.0
    %143 = vmatpush1.msra.mxu0 0.0
    %144 = vmatprep.subr.mxu0 0.0
    %145 = vmatpush1.msra.mxu0 0.0
    %146 = vmatprep.subr.mxu0 0.0
    %147 = vmatpush1.msra.mxu0 0.0
    %148 = vmatprep.subr.mxu0 0.0
    %149 = vmatpush1.msra.mxu0 0.0
    %150 = vmatprep.subr.mxu0 0.0
    %151 = vmatpush1.msra.mxu0 0.0
    %152 = vmatprep.subr.mxu0 0.0
    %153 = vmatpush1.msra.mxu0 0.0
    %154 = vmatprep.subr.mxu0 0.0
    %155 = vmatpush1.msra.mxu0 0.0
    %156 = vmatprep.subr.mxu0 0.0
    %157 = vmatpush1.msra.mxu0 0.0
    %158 = vmatprep.subr.mxu0 0.0
    %159 = vmatpush1.msra.mxu0 0.0
    %160 = vmatprep.subr.mxu0 0.0
    %161 = vmatpush1.msra.mxu0 0.0
    %162 = vmatprep.subr.mxu0 0.0
    %163 = vmatpush1.msra.mxu0 0.0
    %164 = vmatprep.subr.mxu0 0.0
    %165 = vmatpush1.msra.mxu0 0.0
    %166 = vmatprep.subr.mxu0 0.0
    %167 = vmatpush1.msra.mxu0 0.0
    %168 = vmatprep.subr.mxu0 0.0
    %169 = vmatpush1.msra.mxu0 0.0
    %170 = vmatprep.subr.mxu0 0.0
    %171 = vmatpush1.msra.mxu0 0.0
    %172 = vmatprep.subr.mxu0 0.0
    %173 = vmatpush1.msra.mxu0 0.0
    %174 = vmatprep.subr.mxu0 0.0
    %175 = vmatpush1.msra.mxu0 0.0
    %176 = vmatprep.subr.mxu0 0.0
    %177 = vmatpush1.msra.mxu0 0.0
    %178 = vmatprep.subr.mxu0 0.0
    %179 = vmatpush1.msra.mxu0 0.0
    %180 = vmatprep.mubr.f32.mxu0 0.0
    %181 = vmatmul.mubr.f32.gmra.mrb[0].mxu0 %v114
    %v182 = vpop.f32.mrb[0].mxu0
    %v183 = vadd.f32 0.0, %v182
    %v184 = vpop.f32.mrb[0].mxu0
    %185 = vdwg.mxu0
    %v187 = vsel %vm112, %v101, 0
    %189 = vmatprep.subr.mxu0 0.0
    %190 = vmatpush1.msra.mxu0 %v104
    %191 = vmatprep.subr.mxu0 0.0
    %192 = vmatpush1.msra.mxu0 %v105
    %193 = vmatprep.subr.mxu0 0.0
    %194 = vmatpush1.msra.mxu0 %v106
    %195 = vmatprep.subr.mxu0 0.0
    %196 = vmatpush1.msra.mxu0 %v107
    %197 = vmatprep.subr.mxu0 0.0
    %198 = vmatpush1.msra.mxu0 0.0
    %199 = vmatprep.subr.mxu0 0.0
    %200 = vmatpush1.msra.mxu0 0.0
    %201 = vmatprep.subr.mxu0 0.0
    %202 = vmatpush1.msra.mxu0 0.0
    %203 = vmatprep.subr.mxu0 0.0
    %204 = vmatpush1.msra.mxu0 0.0
    %205 = vmatprep.subr.mxu0 0.0
    %206 = vmatpush1.msra.mxu0 0.0
    %207 = vmatprep.subr.mxu0 0.0
    %208 = vmatpush1.msra.mxu0 0.0
    %209 = vmatprep.subr.mxu0 0.0
    %210 = vmatpush1.msra.mxu0 0.0
    %211 = vmatprep.subr.mxu0 0.0
    %212 = vmatpush1.msra.mxu0 0.0
    %213 = vmatprep.subr.mxu0 0.0
    %214 = vmatpush1.msra.mxu0 0.0
    %215 = vmatprep.subr.mxu0 0.0
    %216 = vmatpush1.msra.mxu0 0.0
    %217 = vmatprep.subr.mxu0 0.0
    %218 = vmatpush1.msra.mxu0 0.0
    %219 = vmatprep.subr.mxu0 0.0
    %220 = vmatpush1.msra.mxu0 0.0
    %221 = vmatprep.subr.mxu0 0.0
    %222 = vmatpush1.msra.mxu0 0.0
    %223 = vmatprep.subr.mxu0 0.0
    %224 = vmatpush1.msra.mxu0 0.0
    %225 = vmatprep.subr.mxu0 0.0
    %226 = vmatpush1.msra.mxu0 0.0
    %227 = vmatprep.subr.mxu0 0.0
    %228 = vmatpush1.msra.mxu0 0.0
    %229 = vmatprep.subr.mxu0 0.0
    %230 = vmatpush1.msra.mxu0 0.0
    %231 = vmatprep.subr.mxu0 0.0
    %232 = vmatpush1.msra.mxu0 0.0
    %233 = vmatprep.subr.mxu0 0.0
    %234 = vmatpush1.msra.mxu0 0.0
    %235 = vmatprep.subr.mxu0 0.0
    %236 = vmatpush1.msra.mxu0 0.0
    %237 = vmatprep.subr.mxu0 0.0
    %238 = vmatpush1.msra.mxu0 0.0
    %239 = vmatprep.subr.mxu0 0.0
    %240 = vmatpush1.msra.mxu0 0.0
    %241 = vmatprep.subr.mxu0 0.0
    %242 = vmatpush1.msra.mxu0 0.0
    %243 = vmatprep.subr.mxu0 0.0
    %244 = vmatpush1.msra.mxu0 0.0
    %245 = vmatprep.subr.mxu0 0.0
    %246 = vmatpush1.msra.mxu0 0.0
    %247 = vmatprep.subr.mxu0 0.0
    %248 = vmatpush1.msra.mxu0 0.0
    %249 = vmatprep.subr.mxu0 0.0
    %250 = vmatpush1.msra.mxu0 0.0
    %251 = vmatprep.subr.mxu0 0.0
    %252 = vmatpush1.msra.mxu0 0.0
    %253 = vmatprep.mubr.f32.mxu0 0.0
    %254 = vmatmul.mubr.f32.gmra.mrb[0].mxu0 %v187
    %v255 = vpop.f32.mrb[0].mxu0
    %v256 = vadd.f32 %v183, %v255
    %v257 = vpop.f32.mrb[0].mxu0
    %258 = vdwg.mxu0
    %v259 = vld [vmem:[#allocation11] sm:$0x1]
    %v261 = vlaneseq
    %v262 = vshrl.u32 %v261, 7
    %v263 = vsub.s32 0, %v262
    %v264 = vrot.slane %v259, %v263
    %v266 = vadd.f32 %v256, %v264
    %v267 = vxor.u32 %v266, 2147483648
    %v268 = vmul.f32 %v267, 1.442695
    %v269 = vpow.pop %v268
    %v270 = vadd.f32 %v269, 1.0
    %v271 = vrcp.pop %v270
    %v272 = vmul.f32 1.0, %v271
    %v273 = vtanh.pop %v266
    %275 = vrot.lane.b32.xlu0 %v103, 32
    %v276 = vpop.permute.xlu0 %275
    %v278 = vmul.f32 %v272, %v276
    %280 = vrot.lane.b32.xlu0 %v273, 32
    %v281 = vpop.permute.xlu0 %280
    %v283 = vmul.f32 %v272, %v281
    %285 = vrot.lane.b32.xlu0 %v283, 32
    %v286 = vpop.permute.xlu0 %285
    %v288 = vadd.f32 %v278, %v286
    %v289 = vtanh.pop %v288
    %291 = vrot.lane.b32.xlu0 %v289, 32
    %v292 = vpop.permute.xlu0 %291
    %v294 = vmul.f32 %v272, %v292
    %296 = vrot.lane.b32.xlu0 %v288, 96
    %v297 = vpop.permute.xlu0 %296
    %299 = vst.msk [vmem:[#allocation14] sm:$0xff] %vm112, %v297
    %301 = vrot.lane.b32.xlu0 %v294, 64
    %v302 = vpop.permute.xlu0 %301
    %304 = vst.msk [vmem:[#allocation13] sm:$0xff] %vm112, %v302
    // Predicated region
    $region50: #{tpu_custom_call.1} parent=1 // pred_check
      _
    $region51: #{tpu_custom_call.1} parent=1 // pred_check_branch
      %306 = sbr.rel (0) target = $region53
    $region52: #{tpu_custom_call.1} parent=1 // pred_region
      %s308 = ssub.s32 128, 128
      %309 = vsyncadd [#allocation4], %s308
      %s311 = sshll.u32 [#allocation13], 4
      %s312 = int_to_ptr.vmem [resolvable:$true] %s311
      %314 = dma.vmem_to_hbm [thread:$0]  %s312, 128, %s6, [#allocation4]
    $region53: #{tpu_custom_call.1} parent=1 // pred_fallthru
      _
    // Predicated region
    $region54: #{tpu_custom_call.1} parent=1 // pred_check
      _
    $region55: #{tpu_custom_call.1} parent=1 // pred_check_branch
      %316 = sbr.rel (0) target = $region57
    $region56: #{tpu_custom_call.1} parent=1 // pred_region
      %s318 = ssub.s32 128, 128
      %319 = vsyncadd [#allocation15], %s318
      %s321 = sshll.u32 [#allocation14], 4
      %s322 = int_to_ptr.vmem [resolvable:$true] %s321
      %324 = dma.vmem_to_hbm [thread:$0]  %s322, 128, %s7, [#allocation15]
    $region57: #{tpu_custom_call.1} parent=1 // pred_fallthru
      _
    // Predicated region
    $region58: #{tpu_custom_call.1} parent=1 // pred_check
      _
    $region59: #{tpu_custom_call.1} parent=1 // pred_check_branch
      %326 = sbr.rel (0) target = $region61
    $region60: #{tpu_custom_call.1} parent=1 // pred_region
      %327 = dma.done [#allocation4], 128
    $region61: #{tpu_custom_call.1} parent=1 // pred_fallthru
      _
    // Predicated region
    $region62: #{tpu_custom_call.1} parent=1 // pred_check
      _
    $region63: #{tpu_custom_call.1} parent=1 // pred_check_branch
      %329 = sbr.rel (0) target = $region65
    $region64: #{tpu_custom_call.1} parent=1 // pred_region
      %330 = dma.done [#allocation15], 128
    $region65: #{tpu_custom_call.1} parent=1 // pred_fallthru
      _
    %331 = vsyncpa [#allocation3], 1
    %332 = vsyncpa [#allocation6], 1
    %333 = vsyncpa [#allocation9], 1
    %334 = vsyncpa [#allocation12], 1
    %335 = vsyncpa [#allocation4], 1
    %336 = vsyncpa [#allocation15], 1

</llo_original>
